<compile_context>
chip_gen: v5e
topology: v5e:2x2
jax: 0.10.0
libtpu: 0.0.40
codegen_flags: <defaults>
</compile_context>

<pallas_src>
import jax
import jax.numpy as jnp
from jax.experimental import pallas as pl
from jax.experimental.pallas import tpu as pltpu


def mlp_kernel(x_ref,
               w1_ref, b1_ref,
               w2_ref, b2_ref,
               w3_ref, b3_ref,
               w4_ref, b4_ref,
               w5_ref, b5_ref,
               o_ref):
    x = x_ref[...]                                            # (1, TILE_B)

    # layer1 (1 -> 20) + ReLU : outer product on the VPU (K=1, skip the MXU).
    h = jnp.maximum(w1_ref[...] * x + b1_ref[...], 0.0)      # (20, TILE_B)

    # layer2 (20 -> 64) + ReLU
    h = jnp.dot(w2_ref[...], h, preferred_element_type=jnp.float32)
    h = jnp.maximum(h + b2_ref[...], 0.0)                    # (64, TILE_B)

    # layer3 (64 -> 128) + ReLU
    h = jnp.dot(w3_ref[...], h, preferred_element_type=jnp.float32)
    h = jnp.maximum(h + b3_ref[...], 0.0)                    # (128, TILE_B)

    # layer4 (128 -> 64) + ReLU
    h = jnp.dot(w4_ref[...], h, preferred_element_type=jnp.float32)
    h = jnp.maximum(h + b4_ref[...], 0.0)                    # (64, TILE_B)

    # layer5 (64 -> 1), no activation -> lane-dense (1, TILE_B) store.
    out = jnp.dot(w5_ref[...], h, preferred_element_type=jnp.float32)
    o_ref[...] = (out + b5_ref[...]).astype(o_ref.dtype)


def line_forward(x, params, tile_b=512):
    """x: (B, 1) float32 (PyTorch layout).
    params: list of (W, b) with W (out, in) and b (out,) — nn.Linear layout.
    Returns (B, 1) float32."""
    B = x.shape[0]
    assert tile_b % 128 == 0, "batch tile must be a multiple of the 128-lane width"

    # Don't over-pad small batches: clamp tile to the 128-rounded batch size.
    b_rounded = ((B + 127) // 128) * 128
    tile_b = min(tile_b, b_rounded)
    n_blocks = pl.cdiv(B, tile_b)
    B_pad = n_blocks * tile_b

    # Transpose so batch is the lane dimension; zero-pad to a full tile.
    xt = jnp.pad(x[:, 0].reshape(1, B), ((0, 0), (0, B_pad - B)))

    # Weights stay (out, in); biases become (out, 1) columns for lane broadcast.
    flat = []
    for w, b in params:
        flat.extend([w, b.reshape(-1, 1)])

    # Resident tensors: constant block index -> stay in VMEM across grid steps.
    def resident(a):
        nd = a.ndim
        return pl.BlockSpec(a.shape, lambda i, _nd=nd: (0,) * _nd)

    in_specs = ([pl.BlockSpec((1, tile_b), lambda i: (0, i))]
                + [resident(a) for a in flat])
    out_specs = pl.BlockSpec((1, tile_b), lambda i: (0, i))

    out = pl.pallas_call(
        mlp_kernel,
        out_shape=jax.ShapeDtypeStruct((1, B_pad), jnp.float32),
        grid=(n_blocks,),
        in_specs=in_specs,
        out_specs=out_specs,
        compiler_params=pltpu.CompilerParams(
            dimension_semantics=("parallel",)),   # megacore sharding on v7x
    )(xt, *flat)

    return out[0, :B].reshape(B, 1)


def init_params(key):
    """Deterministic init matching nn.Linear defaults: W (out, in), b (out,),
    both U(-1/sqrt(fan_in), 1/sqrt(fan_in))."""
    dims = [(1, 20), (20, 64), (64, 128), (128, 64), (64, 1)]
    params = []
    for (fan_in, fan_out) in dims:
        key, kw, kb = jax.random.split(key, 3)
        bound = 1.0 / jnp.sqrt(float(fan_in))
        w = jax.random.uniform(kw, (fan_out, fan_in), jnp.float32, -bound, bound)
        b = jax.random.uniform(kb, (fan_out,), jnp.float32, -bound, bound)
        params.append((w, b))
    return params


def reference_forward(x, params):
    h = x
    for i, (w, b) in enumerate(params):
        h = h @ w.T + b
        if i < len(params) - 1:
            h = jnp.maximum(h, 0.0)
    return h


if __name__ == "__main__":
    key = jax.random.PRNGKey(0)
    key, kx = jax.random.split(key)
    B = 300  # non-multiple-of-tile batch: exercises padding + multi-step grid
    x = jax.random.normal(kx, (B, 1), jnp.float32)

    params = init_params(key)

    # tile_b=128 -> 3 grid steps (resident weights, pipelined x/out tiles).
    out = line_forward(x, params, tile_b=128)
    out = jax.block_until_ready(out)

    ref = reference_forward(x, params)
    assert out.shape == (B, 1)
    assert jnp.allclose(out, ref, atol=1e-5, rtol=1e-5), (out, ref)

    # Also exercise the single-tile (clamped tile_b) path.
    out2 = jax.block_until_ready(line_forward(x, params, tile_b=512))
    assert jnp.allclose(out2, ref, atol=1e-5, rtol=1e-5)

    print("KERNEL_OK")
</pallas_src>

<mosaic_0001>
module attributes {stable_mosaic.version = 11 : i64} {
  func.func @mlp_kernel(%arg0: i32, %arg1: memref<1x128xf32, #tpu.memory_space<vmem>>, %arg2: memref<20x1xf32, #tpu.memory_space<vmem>>, %arg3: memref<20x1xf32, #tpu.memory_space<vmem>>, %arg4: memref<64x20xf32, #tpu.memory_space<vmem>>, %arg5: memref<64x1xf32, #tpu.memory_space<vmem>>, %arg6: memref<128x64xf32, #tpu.memory_space<vmem>>, %arg7: memref<128x1xf32, #tpu.memory_space<vmem>>, %arg8: memref<64x128xf32, #tpu.memory_space<vmem>>, %arg9: memref<64x1xf32, #tpu.memory_space<vmem>>, %arg10: memref<1x64xf32, #tpu.memory_space<vmem>>, %arg11: memref<1x1xf32, #tpu.memory_space<vmem>>, %arg12: memref<1x128xf32, #tpu.memory_space<vmem>>) attributes {dimension_semantics = [#tpu.dimension_semantics<parallel>], iteration_bounds = array<i64: 3>, scalar_prefetch = 0 : i64, scratch_operands = 0 : i64, tpu.core_type = #tpu.core_type<tc>, window_params = [{transform_indices = @transform_0, window_bounds = array<i64: 1, 128>}, {pipeline_mode = #tpu.pipeline_mode<synchronous>, transform_indices = @transform_1, window_bounds = array<i64: 20, 1>}, {pipeline_mode = #tpu.pipeline_mode<synchronous>, transform_indices = @transform_2, window_bounds = array<i64: 20, 1>}, {pipeline_mode = #tpu.pipeline_mode<synchronous>, transform_indices = @transform_3, window_bounds = array<i64: 64, 20>}, {pipeline_mode = #tpu.pipeline_mode<synchronous>, transform_indices = @transform_4, window_bounds = array<i64: 64, 1>}, {pipeline_mode = #tpu.pipeline_mode<synchronous>, transform_indices = @transform_5, window_bounds = array<i64: 128, 64>}, {pipeline_mode = #tpu.pipeline_mode<synchronous>, transform_indices = @transform_6, window_bounds = array<i64: 128, 1>}, {pipeline_mode = #tpu.pipeline_mode<synchronous>, transform_indices = @transform_7, window_bounds = array<i64: 64, 128>}, {pipeline_mode = #tpu.pipeline_mode<synchronous>, transform_indices = @transform_8, window_bounds = array<i64: 64, 1>}, {pipeline_mode = #tpu.pipeline_mode<synchronous>, transform_indices = @transform_9, window_bounds = array<i64: 1, 64>}, {pipeline_mode = #tpu.pipeline_mode<synchronous>, transform_indices = @transform_10, window_bounds = array<i64: 1, 1>}, {transform_indices = @transform_11, window_bounds = array<i64: 1, 128>}]} {
    %c0 = arith.constant 0 : index
    %c0_0 = arith.constant 0 : index
    %0 = vector.load %arg1[%c0, %c0_0] : memref<1x128xf32, #tpu.memory_space<vmem>>, vector<1x128xf32>
    %c0_1 = arith.constant 0 : index
    %c0_2 = arith.constant 0 : index
    %1 = vector.load %arg2[%c0_1, %c0_2] : memref<20x1xf32, #tpu.memory_space<vmem>>, vector<20x1xf32>
    %2 = vector.broadcast %1 : vector<20x1xf32> to vector<20x128xf32>
    %3 = vector.broadcast %0 : vector<1x128xf32> to vector<20x128xf32>
    %4 = arith.mulf %2, %3 : vector<20x128xf32>
    %c0_3 = arith.constant 0 : index
    %c0_4 = arith.constant 0 : index
    %5 = vector.load %arg3[%c0_3, %c0_4] : memref<20x1xf32, #tpu.memory_space<vmem>>, vector<20x1xf32>
    %6 = vector.broadcast %5 : vector<20x1xf32> to vector<20x128xf32>
    %7 = arith.addf %4, %6 : vector<20x128xf32>
    %cst = arith.constant 0.000000e+00 : f32
    %8 = vector.broadcast %cst : f32 to vector<20x128xf32>
    %9 = arith.maximumf %7, %8 : vector<20x128xf32>
    %c0_5 = arith.constant 0 : index
    %c0_6 = arith.constant 0 : index
    %10 = vector.load %arg4[%c0_5, %c0_6] : memref<64x20xf32, #tpu.memory_space<vmem>>, vector<64x20xf32>
    %cst_7 = arith.constant dense<0.000000e+00> : vector<64x128xf32>
    %11 = tpu.matmul %10, %9, %cst_7 {dimension_numbers = #tpu.dot_dimension_numbers<[1], [0], [0], [1], [0, 0, 1, 1], [], []>} : vector<64x20xf32>, vector<20x128xf32>, vector<64x128xf32> -> vector<64x128xf32>
    %c0_8 = arith.constant 0 : index
    %c0_9 = arith.constant 0 : index
    %12 = vector.load %arg5[%c0_8, %c0_9] : memref<64x1xf32, #tpu.memory_space<vmem>>, vector<64x1xf32>
    %13 = vector.broadcast %12 : vector<64x1xf32> to vector<64x128xf32>
    %14 = arith.addf %11, %13 : vector<64x128xf32>
    %cst_10 = arith.constant 0.000000e+00 : f32
    %15 = vector.broadcast %cst_10 : f32 to vector<64x128xf32>
    %16 = arith.maximumf %14, %15 : vector<64x128xf32>
    %c0_11 = arith.constant 0 : index
    %c0_12 = arith.constant 0 : index
    %17 = vector.load %arg6[%c0_11, %c0_12] : memref<128x64xf32, #tpu.memory_space<vmem>>, vector<128x64xf32>
    %cst_13 = arith.constant dense<0.000000e+00> : vector<128x128xf32>
    %18 = tpu.matmul %17, %16, %cst_13 {dimension_numbers = #tpu.dot_dimension_numbers<[1], [0], [0], [1], [0, 0, 1, 1], [], []>} : vector<128x64xf32>, vector<64x128xf32>, vector<128x128xf32> -> vector<128x128xf32>
    %c0_14 = arith.constant 0 : index
    %c0_15 = arith.constant 0 : index
    %19 = vector.load %arg7[%c0_14, %c0_15] : memref<128x1xf32, #tpu.memory_space<vmem>>, vector<128x1xf32>
    %20 = vector.broadcast %19 : vector<128x1xf32> to vector<128x128xf32>
    %21 = arith.addf %18, %20 : vector<128x128xf32>
    %cst_16 = arith.constant 0.000000e+00 : f32
    %22 = vector.broadcast %cst_16 : f32 to vector<128x128xf32>
    %23 = arith.maximumf %21, %22 : vector<128x128xf32>
    %c0_17 = arith.constant 0 : index
    %c0_18 = arith.constant 0 : index
    %24 = vector.load %arg8[%c0_17, %c0_18] : memref<64x128xf32, #tpu.memory_space<vmem>>, vector<64x128xf32>
    %cst_19 = arith.constant dense<0.000000e+00> : vector<64x128xf32>
    %25 = tpu.matmul %24, %23, %cst_19 {dimension_numbers = #tpu.dot_dimension_numbers<[1], [0], [0], [1], [0, 0, 1, 1], [], []>} : vector<64x128xf32>, vector<128x128xf32>, vector<64x128xf32> -> vector<64x128xf32>
    %c0_20 = arith.constant 0 : index
    %c0_21 = arith.constant 0 : index
    %26 = vector.load %arg9[%c0_20, %c0_21] : memref<64x1xf32, #tpu.memory_space<vmem>>, vector<64x1xf32>
    %27 = vector.broadcast %26 : vector<64x1xf32> to vector<64x128xf32>
    %28 = arith.addf %25, %27 : vector<64x128xf32>
    %cst_22 = arith.constant 0.000000e+00 : f32
    %29 = vector.broadcast %cst_22 : f32 to vector<64x128xf32>
    %30 = arith.maximumf %28, %29 : vector<64x128xf32>
    %c0_23 = arith.constant 0 : index
    %c0_24 = arith.constant 0 : index
    %31 = vector.load %arg10[%c0_23, %c0_24] : memref<1x64xf32, #tpu.memory_space<vmem>>, vector<1x64xf32>
    %cst_25 = arith.constant dense<0.000000e+00> : vector<1x128xf32>
    %32 = tpu.matmul %31, %30, %cst_25 {dimension_numbers = #tpu.dot_dimension_numbers<[1], [0], [0], [1], [0, 0, 1, 1], [], []>} : vector<1x64xf32>, vector<64x128xf32>, vector<1x128xf32> -> vector<1x128xf32>
    %c0_26 = arith.constant 0 : index
    %c0_27 = arith.constant 0 : index
    %33 = vector.load %arg11[%c0_26, %c0_27] : memref<1x1xf32, #tpu.memory_space<vmem>>, vector<1x1xf32>
    %34 = vector.broadcast %33 : vector<1x1xf32> to vector<1x128xf32>
    %35 = arith.addf %32, %34 : vector<1x128xf32>
    %c0_28 = arith.constant 0 : index
    %c0_29 = arith.constant 0 : index
    %36 = vector.load %arg12[%c0_28, %c0_29] : memref<1x128xf32, #tpu.memory_space<vmem>>, vector<1x128xf32>
    tpu.vector_store %arg12[%c0_28, %c0_29], %35 {strides = array<i32>} : memref<1x128xf32, #tpu.memory_space<vmem>>, vector<1x128xf32>,
    return
  }
  func.func @transform_0(%arg0: i32) -> (i32, i32) {
    %c0_i32 = arith.constant 0 : i32
    %c0_i32_0 = arith.constant 0 : i32
    return %c0_i32, %arg0 : i32, i32
  }
  func.func @transform_1(%arg0: i32) -> (i32, i32) {
    %c0_i32 = arith.constant 0 : i32
    %c0_i32_0 = arith.constant 0 : i32
    %c0_i32_1 = arith.constant 0 : i32
    return %c0_i32, %c0_i32_0 : i32, i32
  }
  func.func @transform_2(%arg0: i32) -> (i32, i32) {
    %c0_i32 = arith.constant 0 : i32
    %c0_i32_0 = arith.constant 0 : i32
    %c0_i32_1 = arith.constant 0 : i32
    return %c0_i32, %c0_i32_0 : i32, i32
  }
  func.func @transform_3(%arg0: i32) -> (i32, i32) {
    %c0_i32 = arith.constant 0 : i32
    %c0_i32_0 = arith.constant 0 : i32
    %c0_i32_1 = arith.constant 0 : i32
    return %c0_i32, %c0_i32_0 : i32, i32
  }
  func.func @transform_4(%arg0: i32) -> (i32, i32) {
    %c0_i32 = arith.constant 0 : i32
    %c0_i32_0 = arith.constant 0 : i32
    %c0_i32_1 = arith.constant 0 : i32
    return %c0_i32, %c0_i32_0 : i32, i32
  }
  func.func @transform_5(%arg0: i32) -> (i32, i32) {
    %c0_i32 = arith.constant 0 : i32
    %c0_i32_0 = arith.constant 0 : i32
    %c0_i32_1 = arith.constant 0 : i32
    return %c0_i32, %c0_i32_0 : i32, i32
  }
  func.func @transform_6(%arg0: i32) -> (i32, i32) {
    %c0_i32 = arith.constant 0 : i32
    %c0_i32_0 = arith.constant 0 : i32
    %c0_i32_1 = arith.constant 0 : i32
    return %c0_i32, %c0_i32_0 : i32, i32
  }
  func.func @transform_7(%arg0: i32) -> (i32, i32) {
    %c0_i32 = arith.constant 0 : i32
    %c0_i32_0 = arith.constant 0 : i32
    %c0_i32_1 = arith.constant 0 : i32
    return %c0_i32, %c0_i32_0 : i32, i32
  }
  func.func @transform_8(%arg0: i32) -> (i32, i32) {
    %c0_i32 = arith.constant 0 : i32
    %c0_i32_0 = arith.constant 0 : i32
    %c0_i32_1 = arith.constant 0 : i32
    return %c0_i32, %c0_i32_0 : i32, i32
  }
  func.func @transform_9(%arg0: i32) -> (i32, i32) {
    %c0_i32 = arith.constant 0 : i32
    %c0_i32_0 = arith.constant 0 : i32
    %c0_i32_1 = arith.constant 0 : i32
    return %c0_i32, %c0_i32_0 : i32, i32
  }
  func.func @transform_10(%arg0: i32) -> (i32, i32) {
    %c0_i32 = arith.constant 0 : i32
    %c0_i32_0 = arith.constant 0 : i32
    %c0_i32_1 = arith.constant 0 : i32
    return %c0_i32, %c0_i32_0 : i32, i32
  }
  func.func @transform_11(%arg0: i32) -> (i32, i32) {
    %c0_i32 = arith.constant 0 : i32
    %c0_i32_0 = arith.constant 0 : i32
    return %c0_i32, %arg0 : i32, i32
  }
}

</mosaic_0001>

<llo_original>
// kernel: tpu_custom_call.1
$region0: #{tpu_custom_call.1}
  #allocation0 [shape = 'u32[]', space=smem, size = 0x4, offset = 0x4, fixed_abs, tag = 'smem constant byte address 0x4 - core index']
  #allocation1 [shape = 'u32[72,128]{1,0:T(1,128)}', space=vmem, size = 0x9000, scoped, tag = 'internal scratch']
  #allocation2 [shape = 'f32[1,1]{1,0:T(1,128)S(1)}', space=vmem, size = 0x200, scoped, tag = 'scoped memory for tpu_custom_call.1']
  %s0 = inlined_call_operand.vmem [shape: f32[1,384], index: 0, kind: input, shape index: {}]
  %s1 = inlined_call_operand.vmem [shape: f32[20,1], index: 1, kind: input, shape index: {}]
  %s2 = inlined_call_operand.vmem [shape: f32[20,1], index: 2, kind: input, shape index: {}]
  %s3 = inlined_call_operand.vmem [shape: f32[64,20], index: 3, kind: input, shape index: {}]
  %s4 = inlined_call_operand.vmem [shape: f32[64,1], index: 4, kind: input, shape index: {}]
  %s5 = inlined_call_operand.vmem [shape: f32[128,64], index: 5, kind: input, shape index: {}]
  %s6 = inlined_call_operand.vmem [shape: f32[128,1], index: 6, kind: input, shape index: {}]
  %s7 = inlined_call_operand.vmem [shape: f32[64,128], index: 7, kind: input, shape index: {}]
  %s8 = inlined_call_operand.vmem [shape: f32[64,1], index: 8, kind: input, shape index: {}]
  %s9 = inlined_call_operand.vmem [shape: f32[1,64], index: 9, kind: input, shape index: {}]
  %s10 = inlined_call_operand.<no memory space> [shape: f32[1,1], index: 10, kind: input, shape index: {}]
  %s11 = inlined_call_operand.hbm [shape: f32[1,384], index: 11, kind: output, shape index: {}]
  %s12 = sld [smem:[#allocation0]]
  $region77: #{tpu_custom_call.1} parent=0
    _
  %s14 = ssub.s32 1, %s12
  %s15 = scalar_select 0, %s14, %s12
  %v16 = vstv %s10
  %17 = vst [vmem:[#allocation2] sm:$0x1] %v16
  $region1: #{tpu_custom_call.1} parent=0
    #allocation3 [shape = 'u8[1024]{0}', space=vmem, size = 0x400, scoped, tag = 'output window, operand 0']
    #allocation4 [shape = 's32[2]{0}', space=sflag, size = 0x8, scoped, tag = 'scoped memory for tpu_custom_call.1']
    %18 = vsyncpa [#allocation4], 0
    %s19 = scalar_lea.sflag [#allocation4], 1
    %20 = vsyncpa %s19, 0
    loop: start=0, step=1, limit=5
    $region2: #{tpu_custom_call.1} parent=1 // loop_pre_header
      _
    $region3: #{tpu_custom_call.1} parent=1 // loop_header
      %s22 = sphi 0, %s26
      %p23 = scmp.ge.s32.totalorder %s22, 5
      %s32 = sphi 0, %s34
      %s35 = sphi 0, %s32
      %s36 = sphi 0, %s35
      %s52 = sphi 0, %s36
      %s56 = sphi 0, %s56
      %s58 = sphi 0, %s56
      %s59 = sphi 0, %s58
      %s73 = sphi 0, %s59
      %s77 = sphi 0, %s77
      %s79 = sphi 0, %s77
      %s80 = sphi 0, %s79
      %s94 = sphi 0, %s80
      %s98 = sphi 0, %s98
      %s100 = sphi 0, %s98
      %s101 = sphi 0, %s100
      %s115 = sphi 0, %s101
      %s119 = sphi 0, %s119
      %s121 = sphi 0, %s119
      %s122 = sphi 0, %s121
      %s136 = sphi 0, %s122
      %s140 = sphi 0, %s140
      %s142 = sphi 0, %s140
      %s143 = sphi 0, %s142
      %s157 = sphi 0, %s143
      %s161 = sphi 0, %s161
      %s163 = sphi 0, %s161
      %s164 = sphi 0, %s163
      %s178 = sphi 0, %s164
      %s182 = sphi 0, %s182
      %s184 = sphi 0, %s182
      %s185 = sphi 0, %s184
      %s199 = sphi 0, %s185
      %s203 = sphi 0, %s203
      %s205 = sphi 0, %s203
      %s206 = sphi 0, %s205
      %s220 = sphi 0, %s206
      %s224 = sphi 0, %s224
      %s226 = sphi 0, %s224
      %s227 = sphi 0, %s226
      %s241 = sphi 0, %s227
      %s245 = sphi 0, %s245
      %s247 = sphi 0, %s245
      %s248 = sphi 0, %s247
      %s262 = sphi 0, %s248
      %s268 = sphi 0, %s270
      %s271 = sphi 0, %s268
      %s272 = sphi 0, %s271
      %s288 = sphi 0, %s272
    $region4: #{tpu_custom_call.1} parent=1 // loop_header_branch
      %25 = sbr.rel (%p23) target = $region8
    $region5: #{tpu_custom_call.1} parent=1 // loop_body
      %s27 = ssub.s32 %s22, 1
      %s28 = ssub.s32 %s22, 2
      %s29 = sadd.s32 %s22, 1
      %s30 = ssub.s32 %s22, %s29
      %p31 = scmp.eq.s32.totalorder %s30, 0
      %s33 = sadd.s32 %s32, 1
      %s34 = scalar_select %p31, %s32, %s33
      %p37 = pneg %p31
      %p38 = scmp.eq.s32.totalorder %s22, 2
      %p39 = por %p37, %p38
      %p40 = scmp.ne.s32.totalorder %s32, %s35
      %p41 = scmp.eq.s32.totalorder %s22, 0
      %p42 = por %p40, %p41
      %p43 = scmp.ne.s32.totalorder %s32, %s35
      %p44 = scmp.eq.s32.totalorder %s27, 2
      %p45 = por %p43, %p44
      %p46 = scmp.ne.s32.totalorder %s35, %s36
      %p47 = scmp.eq.s32.totalorder %s27, 0
      %p48 = por %p46, %p47
      %p49 = scmp.ne.s32.totalorder %s35, %s36
      %p50 = scmp.eq.s32.totalorder %s28, 2
      %p51 = por %p49, %p50
      %p53 = scmp.ne.s32.totalorder %s36, %s52
      %p54 = scmp.eq.s32.totalorder %s28, 0
      %p55 = por %p53, %p54
      %s57 = sadd.s32 %s56, 1
      %p60 = scmp.eq.s32.totalorder %s22, 2
      %p61 = scmp.ne.s32.totalorder %s56, %s58
      %p62 = scmp.eq.s32.totalorder %s22, 0
      %p63 = por %p61, %p62
      %p64 = scmp.ne.s32.totalorder %s56, %s58
      %p65 = scmp.eq.s32.totalorder %s27, 2
      %p66 = por %p64, %p65
      %p67 = scmp.ne.s32.totalorder %s58, %s59
      %p68 = scmp.eq.s32.totalorder %s27, 0
      %p69 = por %p67, %p68
      %p70 = scmp.ne.s32.totalorder %s58, %s59
      %p71 = scmp.eq.s32.totalorder %s28, 2
      %p72 = por %p70, %p71
      %p74 = scmp.ne.s32.totalorder %s59, %s73
      %p75 = scmp.eq.s32.totalorder %s28, 0
      %p76 = por %p74, %p75
      %s78 = sadd.s32 %s77, 1
      %p81 = scmp.eq.s32.totalorder %s22, 2
      %p82 = scmp.ne.s32.totalorder %s77, %s79
      %p83 = scmp.eq.s32.totalorder %s22, 0
      %p84 = por %p82, %p83
      %p85 = scmp.ne.s32.totalorder %s77, %s79
      %p86 = scmp.eq.s32.totalorder %s27, 2
      %p87 = por %p85, %p86
      %p88 = scmp.ne.s32.totalorder %s79, %s80
      %p89 = scmp.eq.s32.totalorder %s27, 0
      %p90 = por %p88, %p89
      %p91 = scmp.ne.s32.totalorder %s79, %s80
      %p92 = scmp.eq.s32.totalorder %s28, 2
      %p93 = por %p91, %p92
      %p95 = scmp.ne.s32.totalorder %s80, %s94
      %p96 = scmp.eq.s32.totalorder %s28, 0
      %p97 = por %p95, %p96
      %s99 = sadd.s32 %s98, 1
      %p102 = scmp.eq.s32.totalorder %s22, 2
      %p103 = scmp.ne.s32.totalorder %s98, %s100
      %p104 = scmp.eq.s32.totalorder %s22, 0
      %p105 = por %p103, %p104
      %p106 = scmp.ne.s32.totalorder %s98, %s100
      %p107 = scmp.eq.s32.totalorder %s27, 2
      %p108 = por %p106, %p107
      %p109 = scmp.ne.s32.totalorder %s100, %s101
      %p110 = scmp.eq.s32.totalorder %s27, 0
      %p111 = por %p109, %p110
      %p112 = scmp.ne.s32.totalorder %s100, %s101
      %p113 = scmp.eq.s32.totalorder %s28, 2
      %p114 = por %p112, %p113
      %p116 = scmp.ne.s32.totalorder %s101, %s115
      %p117 = scmp.eq.s32.totalorder %s28, 0
      %p118 = por %p116, %p117
      %s120 = sadd.s32 %s119, 1
      %p123 = scmp.eq.s32.totalorder %s22, 2
      %p124 = scmp.ne.s32.totalorder %s119, %s121
      %p125 = scmp.eq.s32.totalorder %s22, 0
      %p126 = por %p124, %p125
      %p127 = scmp.ne.s32.totalorder %s119, %s121
      %p128 = scmp.eq.s32.totalorder %s27, 2
      %p129 = por %p127, %p128
      %p130 = scmp.ne.s32.totalorder %s121, %s122
      %p131 = scmp.eq.s32.totalorder %s27, 0
      %p132 = por %p130, %p131
      %p133 = scmp.ne.s32.totalorder %s121, %s122
      %p134 = scmp.eq.s32.totalorder %s28, 2
      %p135 = por %p133, %p134
      %p137 = scmp.ne.s32.totalorder %s122, %s136
      %p138 = scmp.eq.s32.totalorder %s28, 0
      %p139 = por %p137, %p138
      %s141 = sadd.s32 %s140, 1
      %p144 = scmp.eq.s32.totalorder %s22, 2
      %p145 = scmp.ne.s32.totalorder %s140, %s142
      %p146 = scmp.eq.s32.totalorder %s22, 0
      %p147 = por %p145, %p146
      %p148 = scmp.ne.s32.totalorder %s140, %s142
      %p149 = scmp.eq.s32.totalorder %s27, 2
      %p150 = por %p148, %p149
      %p151 = scmp.ne.s32.totalorder %s142, %s143
      %p152 = scmp.eq.s32.totalorder %s27, 0
      %p153 = por %p151, %p152
      %p154 = scmp.ne.s32.totalorder %s142, %s143
      %p155 = scmp.eq.s32.totalorder %s28, 2
      %p156 = por %p154, %p155
      %p158 = scmp.ne.s32.totalorder %s143, %s157
      %p159 = scmp.eq.s32.totalorder %s28, 0
      %p160 = por %p158, %p159
      %s162 = sadd.s32 %s161, 1
      %p165 = scmp.eq.s32.totalorder %s22, 2
      %p166 = scmp.ne.s32.totalorder %s161, %s163
      %p167 = scmp.eq.s32.totalorder %s22, 0
      %p168 = por %p166, %p167
      %p169 = scmp.ne.s32.totalorder %s161, %s163
      %p170 = scmp.eq.s32.totalorder %s27, 2
      %p171 = por %p169, %p170
      %p172 = scmp.ne.s32.totalorder %s163, %s164
      %p173 = scmp.eq.s32.totalorder %s27, 0
      %p174 = por %p172, %p173
      %p175 = scmp.ne.s32.totalorder %s163, %s164
      %p176 = scmp.eq.s32.totalorder %s28, 2
      %p177 = por %p175, %p176
      %p179 = scmp.ne.s32.totalorder %s164, %s178
      %p180 = scmp.eq.s32.totalorder %s28, 0
      %p181 = por %p179, %p180
      %s183 = sadd.s32 %s182, 1
      %p186 = scmp.eq.s32.totalorder %s22, 2
      %p187 = scmp.ne.s32.totalorder %s182, %s184
      %p188 = scmp.eq.s32.totalorder %s22, 0
      %p189 = por %p187, %p188
      %p190 = scmp.ne.s32.totalorder %s182, %s184
      %p191 = scmp.eq.s32.totalorder %s27, 2
      %p192 = por %p190, %p191
      %p193 = scmp.ne.s32.totalorder %s184, %s185
      %p194 = scmp.eq.s32.totalorder %s27, 0
      %p195 = por %p193, %p194
      %p196 = scmp.ne.s32.totalorder %s184, %s185
      %p197 = scmp.eq.s32.totalorder %s28, 2
      %p198 = por %p196, %p197
      %p200 = scmp.ne.s32.totalorder %s185, %s199
      %p201 = scmp.eq.s32.totalorder %s28, 0
      %p202 = por %p200, %p201
      %s204 = sadd.s32 %s203, 1
      %p207 = scmp.eq.s32.totalorder %s22, 2
      %p208 = scmp.ne.s32.totalorder %s203, %s205
      %p209 = scmp.eq.s32.totalorder %s22, 0
      %p210 = por %p208, %p209
      %p211 = scmp.ne.s32.totalorder %s203, %s205
      %p212 = scmp.eq.s32.totalorder %s27, 2
      %p213 = por %p211, %p212
      %p214 = scmp.ne.s32.totalorder %s205, %s206
      %p215 = scmp.eq.s32.totalorder %s27, 0
      %p216 = por %p214, %p215
      %p217 = scmp.ne.s32.totalorder %s205, %s206
      %p218 = scmp.eq.s32.totalorder %s28, 2
      %p219 = por %p217, %p218
      %p221 = scmp.ne.s32.totalorder %s206, %s220
      %p222 = scmp.eq.s32.totalorder %s28, 0
      %p223 = por %p221, %p222
      %s225 = sadd.s32 %s224, 1
      %p228 = scmp.eq.s32.totalorder %s22, 2
      %p229 = scmp.ne.s32.totalorder %s224, %s226
      %p230 = scmp.eq.s32.totalorder %s22, 0
      %p231 = por %p229, %p230
      %p232 = scmp.ne.s32.totalorder %s224, %s226
      %p233 = scmp.eq.s32.totalorder %s27, 2
      %p234 = por %p232, %p233
      %p235 = scmp.ne.s32.totalorder %s226, %s227
      %p236 = scmp.eq.s32.totalorder %s27, 0
      %p237 = por %p235, %p236
      %p238 = scmp.ne.s32.totalorder %s226, %s227
      %p239 = scmp.eq.s32.totalorder %s28, 2
      %p240 = por %p238, %p239
      %p242 = scmp.ne.s32.totalorder %s227, %s241
      %p243 = scmp.eq.s32.totalorder %s28, 0
      %p244 = por %p242, %p243
      %s246 = sadd.s32 %s245, 1
      %p249 = scmp.eq.s32.totalorder %s22, 2
      %p250 = scmp.ne.s32.totalorder %s245, %s247
      %p251 = scmp.eq.s32.totalorder %s22, 0
      %p252 = por %p250, %p251
      %p253 = scmp.ne.s32.totalorder %s245, %s247
      %p254 = scmp.eq.s32.totalorder %s27, 2
      %p255 = por %p253, %p254
      %p256 = scmp.ne.s32.totalorder %s247, %s248
      %p257 = scmp.eq.s32.totalorder %s27, 0
      %p258 = por %p256, %p257
      %p259 = scmp.ne.s32.totalorder %s247, %s248
      %p260 = scmp.eq.s32.totalorder %s28, 2
      %p261 = por %p259, %p260
      %p263 = scmp.ne.s32.totalorder %s248, %s262
      %p264 = scmp.eq.s32.totalorder %s28, 0
      %p265 = por %p263, %p264
      %s266 = ssub.s32 %s22, %s29
      %p267 = scmp.eq.s32.totalorder %s266, 0
      %s269 = sadd.s32 %s268, 1
      %s270 = scalar_select %p267, %s268, %s269
      %p273 = pneg %p267
      %p274 = scmp.eq.s32.totalorder %s22, 2
      %p275 = por %p273, %p274
      %p276 = scmp.ne.s32.totalorder %s268, %s271
      %p277 = scmp.eq.s32.totalorder %s22, 0
      %p278 = por %p276, %p277
      %p279 = scmp.ne.s32.totalorder %s268, %s271
      %p280 = scmp.eq.s32.totalorder %s27, 2
      %p281 = por %p279, %p280
      %p282 = scmp.ne.s32.totalorder %s271, %s272
      %p283 = scmp.eq.s32.totalorder %s27, 0
      %p284 = por %p282, %p283
      %p285 = scmp.ne.s32.totalorder %s271, %s272
      %p286 = scmp.eq.s32.totalorder %s28, 2
      %p287 = por %p285, %p286
      %p289 = scmp.ne.s32.totalorder %s272, %s288
      %p290 = scmp.eq.s32.totalorder %s28, 0
      %p291 = por %p289, %p290
      %p292 = scmp.le.s32.totalorder 1, %s22
      %p293 = scmp.lt.s32.totalorder %s22, 4
      %p294 = pnand %p292, %p293
      %p295 = pneg %p294
      // Predicated region
      $region9: #{tpu_custom_call.1} parent=5 // pred_check
        _
      $region10: #{tpu_custom_call.1} parent=5 // pred_check_branch
        %297 = sbr.rel (%p294) target = $region12
      $region11: #{tpu_custom_call.1} parent=5 // pred_region
        %s298 = ssub.s32 %s22, 1
        // Predicated region
        $region13: #{tpu_custom_call.1} parent=11 // pred_check
          %p299 = pneg %p69
        $region14: #{tpu_custom_call.1} parent=11 // pred_check_branch
          %301 = sbr.rel (%p299) target = $region16
        $region15: #{tpu_custom_call.1} parent=11 // pred_region
          _
        $region16: #{tpu_custom_call.1} parent=11 // pred_fallthru
          _
        // Predicated region
        $region17: #{tpu_custom_call.1} parent=11 // pred_check
          %p302 = pneg %p90
        $region18: #{tpu_custom_call.1} parent=11 // pred_check_branch
          %304 = sbr.rel (%p302) target = $region20
        $region19: #{tpu_custom_call.1} parent=11 // pred_region
          _
        $region20: #{tpu_custom_call.1} parent=11 // pred_fallthru
          _
        // Predicated region
        $region21: #{tpu_custom_call.1} parent=11 // pred_check
          %p305 = pneg %p111
        $region22: #{tpu_custom_call.1} parent=11 // pred_check_branch
          %307 = sbr.rel (%p305) target = $region24
        $region23: #{tpu_custom_call.1} parent=11 // pred_region
          _
        $region24: #{tpu_custom_call.1} parent=11 // pred_fallthru
          _
        // Predicated region
        $region25: #{tpu_custom_call.1} parent=11 // pred_check
          %p308 = pneg %p132
        $region26: #{tpu_custom_call.1} parent=11 // pred_check_branch
          %310 = sbr.rel (%p308) target = $region28
        $region27: #{tpu_custom_call.1} parent=11 // pred_region
          _
        $region28: #{tpu_custom_call.1} parent=11 // pred_fallthru
          _
        // Predicated region
        $region29: #{tpu_custom_call.1} parent=11 // pred_check
          %p311 = pneg %p153
        $region30: #{tpu_custom_call.1} parent=11 // pred_check_branch
          %313 = sbr.rel (%p311) target = $region32
        $region31: #{tpu_custom_call.1} parent=11 // pred_region
          _
        $region32: #{tpu_custom_call.1} parent=11 // pred_fallthru
          _
        // Predicated region
        $region33: #{tpu_custom_call.1} parent=11 // pred_check
          %p314 = pneg %p174
        $region34: #{tpu_custom_call.1} parent=11 // pred_check_branch
          %316 = sbr.rel (%p314) target = $region36
        $region35: #{tpu_custom_call.1} parent=11 // pred_region
          _
        $region36: #{tpu_custom_call.1} parent=11 // pred_fallthru
          _
        // Predicated region
        $region37: #{tpu_custom_call.1} parent=11 // pred_check
          %p317 = pneg %p195
        $region38: #{tpu_custom_call.1} parent=11 // pred_check_branch
          %319 = sbr.rel (%p317) target = $region40
        $region39: #{tpu_custom_call.1} parent=11 // pred_region
          _
        $region40: #{tpu_custom_call.1} parent=11 // pred_fallthru
          _
        // Predicated region
        $region41: #{tpu_custom_call.1} parent=11 // pred_check
          %p320 = pneg %p216
        $region42: #{tpu_custom_call.1} parent=11 // pred_check_branch
          %322 = sbr.rel (%p320) target = $region44
        $region43: #{tpu_custom_call.1} parent=11 // pred_region
          _
        $region44: #{tpu_custom_call.1} parent=11 // pred_fallthru
          _
        // Predicated region
        $region45: #{tpu_custom_call.1} parent=11 // pred_check
          %p323 = pneg %p237
        $region46: #{tpu_custom_call.1} parent=11 // pred_check_branch
          %325 = sbr.rel (%p323) target = $region48
        $region47: #{tpu_custom_call.1} parent=11 // pred_region
          _
        $region48: #{tpu_custom_call.1} parent=11 // pred_fallthru
          _
        // Predicated region
        $region49: #{tpu_custom_call.1} parent=11 // pred_check
          %p326 = pneg %p258
        $region50: #{tpu_custom_call.1} parent=11 // pred_check_branch
          %328 = sbr.rel (%p326) target = $region52
        $region51: #{tpu_custom_call.1} parent=11 // pred_region
          _
        $region52: #{tpu_custom_call.1} parent=11 // pred_fallthru
          _
      $region12: #{tpu_custom_call.1} parent=5 // pred_fallthru
        _
      %p329 = scmp.lt.s32.totalorder %s22, 3
      // Predicated region
      $region53: #{tpu_custom_call.1} parent=5 // pred_check
        %p330 = pneg %p329
      $region54: #{tpu_custom_call.1} parent=5 // pred_check_branch
        %332 = sbr.rel (%p330) target = $region56
      $region55: #{tpu_custom_call.1} parent=5 // pred_region
        // Predicated region
        $region57: #{tpu_custom_call.1} parent=55 // pred_check
          %p333 = pneg %p42
        $region58: #{tpu_custom_call.1} parent=55 // pred_check_branch
          %335 = sbr.rel (%p333) target = $region60
        $region59: #{tpu_custom_call.1} parent=55 // pred_region
          %p336 = scmp.lt.s32.totalorder %s22, 2
          %s337 = scalar_select %p336, %s22, 2
          %s338 = scalar_lea.vmem %s0, %s337
        $region60: #{tpu_custom_call.1} parent=55 // pred_fallthru
          _
      $region56: #{tpu_custom_call.1} parent=5 // pred_fallthru
        _
      %p339 = scmp.le.s32.totalorder 1, %s22
      %p340 = scmp.lt.s32.totalorder %s22, 4
      %p341 = pnand %p339, %p340
      %p342 = pneg %p341
      // Predicated region
      $region61: #{tpu_custom_call.1} parent=5 // pred_check
        _
      $region62: #{tpu_custom_call.1} parent=5 // pred_check_branch
        %344 = sbr.rel (%p341) target = $region64
      $region63: #{tpu_custom_call.1} parent=5 // pred_region
        %s345 = ssub.s32 %s22, 1
        %p346 = scmp.lt.s32.totalorder %s27, 2
        %s347 = scalar_select %p346, %s27, 2
        %s348 = scalar_lea.vmem %s0, %s347
        %p349 = pneg %p48
        %p350 = pneg %p45
        %p351 = pneg %p69
        %p352 = pneg %p66
        %p353 = pneg %p90
        %p354 = pneg %p87
        %p355 = pneg %p111
        %p356 = pneg %p108
        %p357 = pneg %p132
        %p358 = pneg %p129
        %p359 = pneg %p153
        %p360 = pneg %p150
        %p361 = pneg %p174
        %p362 = pneg %p171
        %p363 = pneg %p195
        %p364 = pneg %p192
        %p365 = pneg %p216
        %p366 = pneg %p213
        %p367 = pneg %p237
        %p368 = pneg %p234
        %p369 = pneg %p258
        %p370 = pneg %p255
        %p371 = pneg %p284
        %p372 = pneg %p281
        %s373 = sand.u32 %s271, 1
        %s374 = scalar_lea.sflag [#allocation4], %s373
        %s375 = sand.u32 %s271, 1
        %s376 = scalar_lea.vmem [#allocation3], %s375
        %p377 = scmp.lt.s32.totalorder %s27, 2
        %s378 = scalar_select %p377, %s27, 2
        %s379 = scalar_lea.vmem %s0, %s378
        %v380 = vld [vmem:[%s379] sm:$0x1]
        %v381 = vld [vmem:[%s1] sm:$0xff]
        %v382 = vld [vmem:[%s1 + $0x8] sm:$0xff]
        %v383 = vld [vmem:[%s1 + $0x10] sm:$0xf]
        %385 = vset.pattern.permute.xlu0 0
        %386 = vperm.xlu0 %385, %v381
        %v387 = vpop.permute.xlu0 %386
        %390 = vset.pattern.permute.xlu0 0
        %391 = vperm.xlu0 %390, %v382
        %v392 = vpop.permute.xlu0 %391
        %395 = vset.pattern.permute.xlu0 0
        %396 = vperm.xlu0 %395, %v383
        %v397 = vpop.permute.xlu0 %396
        %v400 = vperm.slane %v380, 0
        %v402 = vmul.f32 %v387, %v400
        %v403 = vmul.f32 %v392, %v400
        %v404 = vmul.f32 %v397, %v400
        %v405 = vld [vmem:[%s2] sm:$0xff]
        %v406 = vld [vmem:[%s2 + $0x8] sm:$0xff]
        %v407 = vld [vmem:[%s2 + $0x10] sm:$0xf]
        %409 = vset.pattern.permute.xlu0 0
        %410 = vperm.xlu0 %409, %v405
        %v411 = vpop.permute.xlu0 %410
        %414 = vset.pattern.permute.xlu0 0
        %415 = vperm.xlu0 %414, %v406
        %v416 = vpop.permute.xlu0 %415
        %419 = vset.pattern.permute.xlu0 0
        %420 = vperm.xlu0 %419, %v407
        %v421 = vpop.permute.xlu0 %420
        %v423 = vadd.f32 %v402, %v411
        %v424 = vadd.f32 %v403, %v416
        %v425 = vadd.f32 %v404, %v421
        %v426 = vmax.f32 %v423, 0.0
        %v427 = vmax.f32 %v424, 0.0
        %v428 = vmax.f32 %v425, 0.0
        %v429 = vld [vmem:[%s3] sm:$0xff]
        %v430 = vld [vmem:[%s3 + $0x8] sm:$0xff]
        %v431 = vld [vmem:[%s3 + $0x10] sm:$0xff]
        %v432 = vld [vmem:[%s3 + $0x18] sm:$0xff]
        %v433 = vld [vmem:[%s3 + $0x20] sm:$0xff]
        %v434 = vld [vmem:[%s3 + $0x28] sm:$0xff]
        %v435 = vld [vmem:[%s3 + $0x30] sm:$0xff]
        %v436 = vld [vmem:[%s3 + $0x38] sm:$0xff]
        %v437 = vld [vmem:[%s4] sm:$0xff]
        %v438 = vld [vmem:[%s4 + $0x8] sm:$0xff]
        %v439 = vld [vmem:[%s4 + $0x10] sm:$0xff]
        %v440 = vld [vmem:[%s4 + $0x18] sm:$0xff]
        %v441 = vld [vmem:[%s4 + $0x20] sm:$0xff]
        %v442 = vld [vmem:[%s4 + $0x28] sm:$0xff]
        %v443 = vld [vmem:[%s4 + $0x30] sm:$0xff]
        %v444 = vld [vmem:[%s4 + $0x38] sm:$0xff]
        %446 = vset.pattern.permute.xlu0 0
        %447 = vperm.xlu0 %446, %v437
        %v448 = vpop.permute.xlu0 %447
        %451 = vset.pattern.permute.xlu0 0
        %452 = vperm.xlu0 %451, %v438
        %v453 = vpop.permute.xlu0 %452
        %456 = vset.pattern.permute.xlu0 0
        %457 = vperm.xlu0 %456, %v439
        %v458 = vpop.permute.xlu0 %457
        %461 = vset.pattern.permute.xlu0 0
        %462 = vperm.xlu0 %461, %v440
        %v463 = vpop.permute.xlu0 %462
        %466 = vset.pattern.permute.xlu0 0
        %467 = vperm.xlu0 %466, %v441
        %v468 = vpop.permute.xlu0 %467
        %471 = vset.pattern.permute.xlu0 0
        %472 = vperm.xlu0 %471, %v442
        %v473 = vpop.permute.xlu0 %472
        %476 = vset.pattern.permute.xlu0 0
        %477 = vperm.xlu0 %476, %v443
        %v478 = vpop.permute.xlu0 %477
        %481 = vset.pattern.permute.xlu0 0
        %482 = vperm.xlu0 %481, %v444
        %v483 = vpop.permute.xlu0 %482
        %vm485 = vcmask 162816
        %v487 = vsel %vm485, %v429, 0
        %v490 = vsel %vm485, %v430, 0
        %v493 = vsel %vm485, %v431, 0
        %v496 = vsel %vm485, %v432, 0
        %v499 = vsel %vm485, %v433, 0
        %v502 = vsel %vm485, %v434, 0
        %v505 = vsel %vm485, %v435, 0
        %v508 = vsel %vm485, %v436, 0
        %vm510 = vcmask 1043456
        %v512 = vsel %vm510, %v428, 0
        %514 = vmatpush.msra.mxu0 0.0
        %515 = vmatpush.msra.mxu0 0.0
        %516 = vmatpush.msra.mxu0 0.0
        %517 = vmatpush.msra.mxu0 0.0
        %518 = vmatpush.msra.mxu0 0.0
        %519 = vmatpush.msra.mxu0 0.0
        %520 = vmatpush.msra.mxu0 0.0
        %521 = vmatpush.msra.mxu0 0.0
        %522 = vmatpush.msra.mxu0 0.0
        %523 = vmatpush.msra.mxu0 0.0
        %524 = vmatpush.msra.mxu0 0.0
        %525 = vmatpush.msra.mxu0 0.0
        %526 = vmatpush.msra.mxu0 0.0
        %527 = vmatpush.msra.mxu0 %v512
        %528 = vmatpush.msra.mxu0 %v427
        %529 = vmatpush.msra.mxu0 %v426
        %530 = vmatmul.f32.gmra.mxu0 %v487
        %v531 = vpop.f32.mrf.mxu0
        %v532 = vadd.f32 %v448, %v531
        %533 = vmatmul.f32.gmra.mxu0 %v490
        %v534 = vpop.f32.mrf.mxu0
        %v535 = vadd.f32 %v453, %v534
        %536 = vmatmul.f32.gmra.mxu0 %v493
        %v537 = vpop.f32.mrf.mxu0
        %v538 = vadd.f32 %v458, %v537
        %539 = vmatmul.f32.gmra.mxu0 %v496
        %v540 = vpop.f32.mrf.mxu0
        %v541 = vadd.f32 %v463, %v540
        %542 = vmatmul.f32.gmra.mxu0 %v499
        %v543 = vpop.f32.mrf.mxu0
        %v544 = vadd.f32 %v468, %v543
        %545 = vmatmul.f32.gmra.mxu0 %v502
        %v546 = vpop.f32.mrf.mxu0
        %v547 = vadd.f32 %v473, %v546
        %548 = vmatmul.f32.gmra.mxu0 %v505
        %v549 = vpop.f32.mrf.mxu0
        %v550 = vadd.f32 %v478, %v549
        %551 = vmatmul.f32.gmra.mxu0 %v508
        %v552 = vpop.f32.mrf.mxu0
        %v553 = vadd.f32 %v483, %v552
        %554 = vdwg.mxu0
        %v555 = vmax.f32 %v532, 0.0
        %v556 = vmax.f32 %v535, 0.0
        %v557 = vmax.f32 %v538, 0.0
        %v558 = vmax.f32 %v541, 0.0
        %v559 = vmax.f32 %v544, 0.0
        %v560 = vmax.f32 %v547, 0.0
        %v561 = vmax.f32 %v550, 0.0
        %v562 = vmax.f32 %v553, 0.0
        %v563 = vld [vmem:[%s5] sm:$0xff]
        %v564 = vld [vmem:[%s5 + $0x8] sm:$0xff]
        %v565 = vld [vmem:[%s5 + $0x10] sm:$0xff]
        %v566 = vld [vmem:[%s5 + $0x18] sm:$0xff]
        %v567 = vld [vmem:[%s5 + $0x20] sm:$0xff]
        %v568 = vld [vmem:[%s5 + $0x28] sm:$0xff]
        %v569 = vld [vmem:[%s5 + $0x30] sm:$0xff]
        %v570 = vld [vmem:[%s5 + $0x38] sm:$0xff]
        %v571 = vld [vmem:[%s5 + $0x40] sm:$0xff]
        %v572 = vld [vmem:[%s5 + $0x48] sm:$0xff]
        %v573 = vld [vmem:[%s5 + $0x50] sm:$0xff]
        %v574 = vld [vmem:[%s5 + $0x58] sm:$0xff]
        %v575 = vld [vmem:[%s5 + $0x60] sm:$0xff]
        %v576 = vld [vmem:[%s5 + $0x68] sm:$0xff]
        %v577 = vld [vmem:[%s5 + $0x70] sm:$0xff]
        %v578 = vld [vmem:[%s5 + $0x78] sm:$0xff]
        %v579 = vld [vmem:[%s6] sm:$0xff]
        %v580 = vld [vmem:[%s6 + $0x8] sm:$0xff]
        %v581 = vld [vmem:[%s6 + $0x10] sm:$0xff]
        %v582 = vld [vmem:[%s6 + $0x18] sm:$0xff]
        %v583 = vld [vmem:[%s6 + $0x20] sm:$0xff]
        %v584 = vld [vmem:[%s6 + $0x28] sm:$0xff]
        %v585 = vld [vmem:[%s6 + $0x30] sm:$0xff]
        %v586 = vld [vmem:[%s6 + $0x38] sm:$0xff]
        %v587 = vld [vmem:[%s6 + $0x40] sm:$0xff]
        %v588 = vld [vmem:[%s6 + $0x48] sm:$0xff]
        %v589 = vld [vmem:[%s6 + $0x50] sm:$0xff]
        %v590 = vld [vmem:[%s6 + $0x58] sm:$0xff]
        %v591 = vld [vmem:[%s6 + $0x60] sm:$0xff]
        %v592 = vld [vmem:[%s6 + $0x68] sm:$0xff]
        %v593 = vld [vmem:[%s6 + $0x70] sm:$0xff]
        %v594 = vld [vmem:[%s6 + $0x78] sm:$0xff]
        %596 = vset.pattern.permute.xlu0 0
        %597 = vperm.xlu0 %596, %v579
        %v598 = vpop.permute.xlu0 %597
        %601 = vset.pattern.permute.xlu0 0
        %602 = vperm.xlu0 %601, %v580
        %v603 = vpop.permute.xlu0 %602
        %606 = vset.pattern.permute.xlu0 0
        %607 = vperm.xlu0 %606, %v581
        %v608 = vpop.permute.xlu0 %607
        %611 = vset.pattern.permute.xlu0 0
        %612 = vperm.xlu0 %611, %v582
        %v613 = vpop.permute.xlu0 %612
        %616 = vset.pattern.permute.xlu0 0
        %617 = vperm.xlu0 %616, %v583
        %v618 = vpop.permute.xlu0 %617
        %621 = vset.pattern.permute.xlu0 0
        %622 = vperm.xlu0 %621, %v584
        %v623 = vpop.permute.xlu0 %622
        %626 = vset.pattern.permute.xlu0 0
        %627 = vperm.xlu0 %626, %v585
        %v628 = vpop.permute.xlu0 %627
        %631 = vset.pattern.permute.xlu0 0
        %632 = vperm.xlu0 %631, %v586
        %v633 = vpop.permute.xlu0 %632
        %636 = vset.pattern.permute.xlu0 0
        %637 = vperm.xlu0 %636, %v587
        %v638 = vpop.permute.xlu0 %637
        %641 = vset.pattern.permute.xlu0 0
        %642 = vperm.xlu0 %641, %v588
        %v643 = vpop.permute.xlu0 %642
        %646 = vset.pattern.permute.xlu0 0
        %647 = vperm.xlu0 %646, %v589
        %v648 = vpop.permute.xlu0 %647
        %651 = vset.pattern.permute.xlu0 0
        %652 = vperm.xlu0 %651, %v590
        %v653 = vpop.permute.xlu0 %652
        %656 = vset.pattern.permute.xlu0 0
        %657 = vperm.xlu0 %656, %v591
        %v658 = vpop.permute.xlu0 %657
        %661 = vset.pattern.permute.xlu0 0
        %662 = vperm.xlu0 %661, %v592
        %v663 = vpop.permute.xlu0 %662
        %666 = vset.pattern.permute.xlu0 0
        %667 = vperm.xlu0 %666, %v593
        %v668 = vpop.permute.xlu0 %667
        %671 = vset.pattern.permute.xlu0 0
        %672 = vperm.xlu0 %671, %v594
        %v673 = vpop.permute.xlu0 %672
        %vm675 = vcmask 523264
        %v677 = vsel %vm675, %v563, 0
        %v680 = vsel %vm675, %v564, 0
        %v683 = vsel %vm675, %v565, 0
        %v686 = vsel %vm675, %v566, 0
        %v689 = vsel %vm675, %v567, 0
        %v692 = vsel %vm675, %v568, 0
        %v695 = vsel %vm675, %v569, 0
        %v698 = vsel %vm675, %v570, 0
        %v701 = vsel %vm675, %v571, 0
        %v704 = vsel %vm675, %v572, 0
        %v707 = vsel %vm675, %v573, 0
        %v710 = vsel %vm675, %v574, 0
        %v713 = vsel %vm675, %v575, 0
        %v716 = vsel %vm675, %v576, 0
        %v719 = vsel %vm675, %v577, 0
        %v722 = vsel %vm675, %v578, 0
        %724 = vmatpush.msra.mxu0 0.0
        %725 = vmatpush.msra.mxu0 0.0
        %726 = vmatpush.msra.mxu0 0.0
        %727 = vmatpush.msra.mxu0 0.0
        %728 = vmatpush.msra.mxu0 0.0
        %729 = vmatpush.msra.mxu0 0.0
        %730 = vmatpush.msra.mxu0 0.0
        %731 = vmatpush.msra.mxu0 0.0
        %732 = vmatpush.msra.mxu0 %v562
        %733 = vmatpush.msra.mxu0 %v561
        %734 = vmatpush.msra.mxu0 %v560
        %735 = vmatpush.msra.mxu0 %v559
        %736 = vmatpush.msra.mxu0 %v558
        %737 = vmatpush.msra.mxu0 %v557
        %738 = vmatpush.msra.mxu0 %v556
        %739 = vmatpush.msra.mxu0 %v555
        %740 = vmatmul.f32.gmra.mxu0 %v677
        %v741 = vpop.f32.mrf.mxu0
        %v742 = vadd.f32 %v598, %v741
        %743 = vmatmul.f32.gmra.mxu0 %v680
        %v744 = vpop.f32.mrf.mxu0
        %v745 = vadd.f32 %v603, %v744
        %746 = vmatmul.f32.gmra.mxu0 %v683
        %v747 = vpop.f32.mrf.mxu0
        %v748 = vadd.f32 %v608, %v747
        %749 = vmatmul.f32.gmra.mxu0 %v686
        %v750 = vpop.f32.mrf.mxu0
        %v751 = vadd.f32 %v613, %v750
        %752 = vmatmul.f32.gmra.mxu0 %v689
        %v753 = vpop.f32.mrf.mxu0
        %v754 = vadd.f32 %v618, %v753
        %755 = vmatmul.f32.gmra.mxu0 %v692
        %v756 = vpop.f32.mrf.mxu0
        %v757 = vadd.f32 %v623, %v756
        %758 = vmatmul.f32.gmra.mxu0 %v695
        %v759 = vpop.f32.mrf.mxu0
        %v760 = vadd.f32 %v628, %v759
        %761 = vmatmul.f32.gmra.mxu0 %v698
        %v762 = vpop.f32.mrf.mxu0
        %v763 = vadd.f32 %v633, %v762
        %764 = vmatmul.f32.gmra.mxu0 %v701
        %v765 = vpop.f32.mrf.mxu0
        %v766 = vadd.f32 %v638, %v765
        %767 = vmatmul.f32.gmra.mxu0 %v704
        %v768 = vpop.f32.mrf.mxu0
        %v769 = vadd.f32 %v643, %v768
        %770 = vmatmul.f32.gmra.mxu0 %v707
        %v771 = vpop.f32.mrf.mxu0
        %v772 = vadd.f32 %v648, %v771
        %773 = vmatmul.f32.gmra.mxu0 %v710
        %v774 = vpop.f32.mrf.mxu0
        %v775 = vadd.f32 %v653, %v774
        %776 = vmatmul.f32.gmra.mxu0 %v713
        %v777 = vpop.f32.mrf.mxu0
        %v778 = vadd.f32 %v658, %v777
        %779 = vmatmul.f32.gmra.mxu0 %v716
        %v780 = vpop.f32.mrf.mxu0
        %v781 = vadd.f32 %v663, %v780
        %782 = vmatmul.f32.gmra.mxu0 %v719
        %v783 = vpop.f32.mrf.mxu0
        %v784 = vadd.f32 %v668, %v783
        %785 = vmatmul.f32.gmra.mxu0 %v722
        %v786 = vpop.f32.mrf.mxu0
        %v787 = vadd.f32 %v673, %v786
        %788 = vdwg.mxu0
        %v789 = vmax.f32 %v742, 0.0
        %v790 = vmax.f32 %v745, 0.0
        %v791 = vmax.f32 %v748, 0.0
        %v792 = vmax.f32 %v751, 0.0
        %v793 = vmax.f32 %v754, 0.0
        %v794 = vmax.f32 %v757, 0.0
        %v795 = vmax.f32 %v760, 0.0
        %v796 = vmax.f32 %v763, 0.0
        %v797 = vmax.f32 %v766, 0.0
        %v798 = vmax.f32 %v769, 0.0
        %v799 = vmax.f32 %v772, 0.0
        %v800 = vmax.f32 %v775, 0.0
        %v801 = vmax.f32 %v778, 0.0
        %v802 = vmax.f32 %v781, 0.0
        %v803 = vmax.f32 %v784, 0.0
        %v804 = vmax.f32 %v787, 0.0
        %v805 = vld [vmem:[%s7] sm:$0xff]
        %v806 = vld [vmem:[%s7 + $0x8] sm:$0xff]
        %v807 = vld [vmem:[%s7 + $0x10] sm:$0xff]
        %v808 = vld [vmem:[%s7 + $0x18] sm:$0xff]
        %v809 = vld [vmem:[%s7 + $0x20] sm:$0xff]
        %v810 = vld [vmem:[%s7 + $0x28] sm:$0xff]
        %v811 = vld [vmem:[%s7 + $0x30] sm:$0xff]
        %v812 = vld [vmem:[%s7 + $0x38] sm:$0xff]
        %v813 = vld [vmem:[%s8] sm:$0xff]
        %v814 = vld [vmem:[%s8 + $0x8] sm:$0xff]
        %v815 = vld [vmem:[%s8 + $0x10] sm:$0xff]
        %v816 = vld [vmem:[%s8 + $0x18] sm:$0xff]
        %v817 = vld [vmem:[%s8 + $0x20] sm:$0xff]
        %v818 = vld [vmem:[%s8 + $0x28] sm:$0xff]
        %v819 = vld [vmem:[%s8 + $0x30] sm:$0xff]
        %v820 = vld [vmem:[%s8 + $0x38] sm:$0xff]
        %822 = vset.pattern.permute.xlu0 0
        %823 = vperm.xlu0 %822, %v813
        %v824 = vpop.permute.xlu0 %823
        %827 = vset.pattern.permute.xlu0 0
        %828 = vperm.xlu0 %827, %v814
        %v829 = vpop.permute.xlu0 %828
        %832 = vset.pattern.permute.xlu0 0
        %833 = vperm.xlu0 %832, %v815
        %v834 = vpop.permute.xlu0 %833
        %837 = vset.pattern.permute.xlu0 0
        %838 = vperm.xlu0 %837, %v816
        %v839 = vpop.permute.xlu0 %838
        %842 = vset.pattern.permute.xlu0 0
        %843 = vperm.xlu0 %842, %v817
        %v844 = vpop.permute.xlu0 %843
        %847 = vset.pattern.permute.xlu0 0
        %848 = vperm.xlu0 %847, %v818
        %v849 = vpop.permute.xlu0 %848
        %852 = vset.pattern.permute.xlu0 0
        %853 = vperm.xlu0 %852, %v819
        %v854 = vpop.permute.xlu0 %853
        %857 = vset.pattern.permute.xlu0 0
        %858 = vperm.xlu0 %857, %v820
        %v859 = vpop.permute.xlu0 %858
        %861 = vmatpush.msra.mxu0 %v804
        %862 = vmatpush.msra.mxu0 %v803
        %863 = vmatpush.msra.mxu0 %v802
        %864 = vmatpush.msra.mxu0 %v801
        %865 = vmatpush.msra.mxu0 %v800
        %866 = vmatpush.msra.mxu0 %v799
        %867 = vmatpush.msra.mxu0 %v798
        %868 = vmatpush.msra.mxu0 %v797
        %869 = vmatpush.msra.mxu0 %v796
        %870 = vmatpush.msra.mxu0 %v795
        %871 = vmatpush.msra.mxu0 %v794
        %872 = vmatpush.msra.mxu0 %v793
        %873 = vmatpush.msra.mxu0 %v792
        %874 = vmatpush.msra.mxu0 %v791
        %875 = vmatpush.msra.mxu0 %v790
        %876 = vmatpush.msra.mxu0 %v789
        %877 = vmatmul.f32.gmra.mxu0 %v805
        %v878 = vpop.f32.mrf.mxu0
        %v879 = vadd.f32 %v824, %v878
        %880 = vmatmul.f32.gmra.mxu0 %v806
        %v881 = vpop.f32.mrf.mxu0
        %v882 = vadd.f32 %v829, %v881
        %883 = vmatmul.f32.gmra.mxu0 %v807
        %v884 = vpop.f32.mrf.mxu0
        %v885 = vadd.f32 %v834, %v884
        %886 = vmatmul.f32.gmra.mxu0 %v808
        %v887 = vpop.f32.mrf.mxu0
        %v888 = vadd.f32 %v839, %v887
        %889 = vmatmul.f32.gmra.mxu0 %v809
        %v890 = vpop.f32.mrf.mxu0
        %v891 = vadd.f32 %v844, %v890
        %892 = vmatmul.f32.gmra.mxu0 %v810
        %v893 = vpop.f32.mrf.mxu0
        %v894 = vadd.f32 %v849, %v893
        %895 = vmatmul.f32.gmra.mxu0 %v811
        %v896 = vpop.f32.mrf.mxu0
        %v897 = vadd.f32 %v854, %v896
        %898 = vmatmul.f32.gmra.mxu0 %v812
        %v899 = vpop.f32.mrf.mxu0
        %v900 = vadd.f32 %v859, %v899
        %901 = vdwg.mxu0
        %v902 = vmax.f32 %v879, 0.0
        %v903 = vmax.f32 %v882, 0.0
        %v904 = vmax.f32 %v885, 0.0
        %v905 = vmax.f32 %v888, 0.0
        %v906 = vmax.f32 %v891, 0.0
        %v907 = vmax.f32 %v894, 0.0
        %v908 = vmax.f32 %v897, 0.0
        %v909 = vmax.f32 %v900, 0.0
        %v910 = vld [vmem:[%s9] sm:$0x1]
        %v911 = vld [vmem:[#allocation2] sm:$0x1]
        %913 = vset.pattern.permute.xlu0 0
        %914 = vperm.xlu0 %913, %v911
        %v915 = vpop.permute.xlu0 %914
        %v917 = vperm.slane %v915, 0
        %v919 = vsel %vm675, %v910, 0
        %921 = vmatpush.msra.mxu0 0.0
        %922 = vmatpush.msra.mxu0 0.0
        %923 = vmatpush.msra.mxu0 0.0
        %924 = vmatpush.msra.mxu0 0.0
        %925 = vmatpush.msra.mxu0 0.0
        %926 = vmatpush.msra.mxu0 0.0
        %927 = vmatpush.msra.mxu0 0.0
        %928 = vmatpush.msra.mxu0 0.0
        %929 = vmatpush.msra.mxu0 %v909
        %930 = vmatpush.msra.mxu0 %v908
        %931 = vmatpush.msra.mxu0 %v907
        %932 = vmatpush.msra.mxu0 %v906
        %933 = vmatpush.msra.mxu0 %v905
        %934 = vmatpush.msra.mxu0 %v904
        %935 = vmatpush.msra.mxu0 %v903
        %936 = vmatpush.msra.mxu0 %v902
        %937 = vmatmul.f32.gmra.mxu0 %v919
        %v938 = vpop.f32.mrf.mxu0
        %v939 = vadd.f32 %v917, %v938
        %940 = vdwg.mxu0
        %941 = vst [vmem:[%s376] sm:$0x1] %v939
        %s942 = sand.u32 %s271, 1
        %s943 = scalar_lea.sflag [#allocation4], %s942
        %s944 = sand.u32 %s271, 1
        %s945 = scalar_lea.vmem [#allocation3], %s944
        // Predicated region
        $region65: #{tpu_custom_call.1} parent=63 // pred_check
          %p946 = pneg %p281
        $region66: #{tpu_custom_call.1} parent=63 // pred_check_branch
          %948 = sbr.rel (%p946) target = $region68
        $region67: #{tpu_custom_call.1} parent=63 // pred_region
          %950 = vsyncadd %s943, 0
          %s951 = scalar_lea.hbm %s11, %s27
          %s953 = sshll.u32 %s945, 4
          %s954 = int_to_ptr.vmem [resolvable:$true] %s953
          %s955 = sshll.u32 %s951, 4
          %s956 = int_to_ptr.hbm [resolvable:$true] %s955
          %958 = dma.vmem_to_hbm [thread:$0]  %s954, 16, %s956, %s943
        $region68: #{tpu_custom_call.1} parent=63 // pred_fallthru
          _
      $region64: #{tpu_custom_call.1} parent=5 // pred_fallthru
        _
      %p959 = scmp.le.s32.totalorder 2, %s22
      // Predicated region
      $region69: #{tpu_custom_call.1} parent=5 // pred_check
        %p960 = pneg %p959
      $region70: #{tpu_custom_call.1} parent=5 // pred_check_branch
        %962 = sbr.rel (%p960) target = $region72
      $region71: #{tpu_custom_call.1} parent=5 // pred_region
        %s963 = ssub.s32 %s22, 2
        // Predicated region
        $region73: #{tpu_custom_call.1} parent=71 // pred_check
          %p964 = pneg %p287
        $region74: #{tpu_custom_call.1} parent=71 // pred_check_branch
          %966 = sbr.rel (%p964) target = $region76
        $region75: #{tpu_custom_call.1} parent=71 // pred_region
          %s967 = sand.u32 %s272, 1
          %s968 = scalar_lea.sflag [#allocation4], %s967
          %s969 = sand.u32 %s272, 1
          %s970 = scalar_lea.vmem [#allocation3], %s969
          %972 = dma.done %s968, 16
        $region76: #{tpu_custom_call.1} parent=71 // pred_fallthru
          _
      $region72: #{tpu_custom_call.1} parent=5 // pred_fallthru
        _
    $region6: #{tpu_custom_call.1} parent=1 // loop_footer
      %s26 = sadd.s32 1, %s22
    $region7: #{tpu_custom_call.1} parent=1 // loop_footer_branch
      %21 = sbr.rel target = $region3
    $region8: #{tpu_custom_call.1} parent=1 // loop_exit
      _
    %973 = vsyncpa [#allocation4], 1
    %s974 = scalar_lea.sflag [#allocation4], 1
    %975 = vsyncpa %s974, 1

</llo_original>
